<compile_context>
chip_gen: v6e
topology: v6e:2x2x1
jax: 0.10.0
libtpu: 0.0.40
codegen_flags: <defaults>
</compile_context>

<pallas_src>
import functools

import jax
import jax.numpy as jnp
from jax.experimental import pallas as pl
from jax.experimental.pallas import tpu as pltpu

_LANE = 128      # lane width (last dim)
_SUBLANE = 8     # sublane width (second-to-last dim)


def _round_up(x, m):
    return ((x + m - 1) // m) * m


def _cdiv(a, b):
    return (a + b - 1) // b


# ------------------------------ fused kernel --------------------------------

def _mlp_kernel(x_ref, w1_ref, b1_ref, w2_ref, b2_ref, *rest, apply_relu):
    """One row-tile of: out = dropout(act(x @ W1 + b1)) @ W2 + b2."""
    if len(rest) == 2:
        mask_ref, o_ref = rest            # training mode: pre-scaled keep mask
    else:
        (o_ref,) = rest
        mask_ref = None

    # MXU pass 1: bf16 feed, f32 accumulation.  Epilogue stays f32 on the VPU.
    h = jnp.dot(x_ref[...].astype(jnp.bfloat16), w1_ref[...],
                preferred_element_type=jnp.float32) + b1_ref[...]
    if apply_relu:
        h = jnp.maximum(h, 0.0)
    if mask_ref is not None:
        h = h * mask_ref[...]             # mask already scaled by 1/(1-p)

    # MXU pass 2: bf16 feed, f32 accumulation, lane-dense store.
    o_ref[...] = (jnp.dot(h.astype(jnp.bfloat16), w2_ref[...],
                          preferred_element_type=jnp.float32)
                  + b2_ref[...]).astype(o_ref.dtype)


# --------------------------- one-time param prep ------------------------------

def prepare_mlp_params(w1, b1, w2, b2, *, lane_multiple=_LANE):
    """One-time padding/cast of the MLP parameters (hoisted out of the hot path).

    Weights are stored (in, out) in bf16 with hidden/output feature dims zero-padded
    to `lane_multiple` (use 256 on v6e/v7x for large layers to fill the 256x256 MXU).
    Zero padding is inert: padded hidden columns see bias 0 -> relu(0) = 0, and the
    matching W2 rows are zero.
    """
    din, hidden = w1.shape
    hidden2, dout = w2.shape
    assert hidden == hidden2 and b1.shape == (hidden,) and b2.shape == (dout,)
    h_p = _round_up(hidden, lane_multiple)
    dout_p = _round_up(dout, lane_multiple)
    w1p = jnp.zeros((din, h_p), jnp.bfloat16).at[:, :hidden].set(w1.astype(jnp.bfloat16))
    b1p = jnp.zeros((1, h_p), jnp.float32).at[:, :hidden].set(b1.astype(jnp.float32))
    w2p = jnp.zeros((h_p, dout_p), jnp.bfloat16).at[:hidden, :dout].set(w2.astype(jnp.bfloat16))
    b2p = jnp.zeros((1, dout_p), jnp.float32).at[:, :dout].set(b2.astype(jnp.float32))
    return dict(w1=w1p, b1=b1p, w2=w2p, b2=b2p,
                input_dim=din, hidden_dim=hidden, output_dim=dout)


def make_dropout_mask(key, batch, hidden_padded, rate):
    """Pre-scaled keep-mask (portable replacement for the in-kernel TPU PRNG)."""
    if rate >= 1.0:                       # avoid 1/(1-p) blow-up; everything dropped
        return jnp.zeros((batch, hidden_padded), jnp.float32)
    keep = jax.random.bernoulli(key, 1.0 - rate, (batch, hidden_padded))
    return keep.astype(jnp.float32) * (1.0 / (1.0 - rate))


# -------------------------------- wrapper ------------------------------------

def mlp_forward(x, prepared, *, activation="relu", dropout_rate=0.1,
                training=False, rng_key=None, block_rows=256):
    """Fused MLP forward. x: (B, Din) float32. Returns (B, Dout) float32."""
    B, Din = x.shape
    assert Din == prepared["input_dim"]
    w1p, b1p, w2p, b2p = prepared["w1"], prepared["b1"], prepared["w2"], prepared["b2"]
    H_p, Dout_p = w1p.shape[1], w2p.shape[1]
    Dout = prepared["output_dim"]

    # Row tile: multiple of 8 sublanes; prefer >=2 tiles so both v7x TCs get work.
    if B > block_rows:
        tm = block_rows
    else:
        half = _round_up(_cdiv(B, 2), _SUBLANE)
        tm = half if 0 < half < B else B
    grid = (_cdiv(B, tm),)

    apply_dropout = bool(training) and float(dropout_rate) > 0.0

    x = x.astype(jnp.float32)
    inputs = [x, w1p, b1p, w2p, b2p]
    in_specs = [
        pl.BlockSpec((tm, Din), lambda i: (i, 0)),                               # x row-tile
        pl.BlockSpec((Din, H_p), lambda i: (0, 0), pipeline_mode=pl.Buffered(1)),  # W1 resident
        pl.BlockSpec((1, H_p), lambda i: (0, 0), pipeline_mode=pl.Buffered(1)),    # b1 resident
        pl.BlockSpec((H_p, Dout_p), lambda i: (0, 0), pipeline_mode=pl.Buffered(1)),  # W2 resident
        pl.BlockSpec((1, Dout_p), lambda i: (0, 0), pipeline_mode=pl.Buffered(1)),    # b2 resident
    ]

    if apply_dropout:
        if rng_key is None:
            rng_key = jax.random.PRNGKey(0)
        mask = make_dropout_mask(rng_key, B, H_p, float(dropout_rate))
        inputs.append(mask)
        in_specs.append(pl.BlockSpec((tm, H_p), lambda i: (i, 0)))

    # Explicit VMEM budget (resident bf16 weights, double-buffered row tiles) + headroom.
    vmem_needed = (
        2 * tm * Din * 4                     # x tile (double-buffered)
        + Din * H_p * 2 + H_p * 4            # W1 + b1 (single-buffered, resident)
        + H_p * Dout_p * 2 + Dout_p * 4      # W2 + b2 (single-buffered, resident)
        + 2 * tm * Dout_p * 4                # out tile (double-buffered)
        + 2 * tm * H_p * 4                   # hidden intermediate + slack
        + (2 * tm * H_p * 4 if apply_dropout else 0)   # mask tile
    )
    vmem_limit = int(min(128 * 1024 * 1024, max(32 * 1024 * 1024, 2 * vmem_needed)))

    flops = 2 * B * (Din * H_p + H_p * Dout_p)
    bytes_accessed = (B * Din * 4 + Din * H_p * 2 + H_p * 4 + H_p * Dout_p * 2
                      + Dout_p * 4 + B * Dout_p * 4
                      + (B * H_p * 4 if apply_dropout else 0))

    kernel = functools.partial(_mlp_kernel, apply_relu=(activation == "relu"))

    out = pl.pallas_call(
        kernel,
        out_shape=jax.ShapeDtypeStruct((B, Dout_p), jnp.float32),
        grid=grid,
        in_specs=in_specs,
        out_specs=pl.BlockSpec((tm, Dout_p), lambda i: (i, 0)),
        compiler_params=pltpu.CompilerParams(
            dimension_semantics=("parallel",),      # independent row tiles -> dual-TC on v7x
            vmem_limit_bytes=vmem_limit,
        ),
        cost_estimate=pl.CostEstimate(flops=flops, transcendentals=0,
                                      bytes_accessed=bytes_accessed),
    )(*inputs)

    return out[:, :Dout]


# -------------------------- pure-JAX reference --------------------------------

def reference_forward(x, w1, b1, w2, b2, *, activation="relu", keep_mask=None):
    """Reference with the same bf16-feed / f32-accumulate numerics as the kernel."""
    h = jnp.dot(x.astype(jnp.bfloat16), w1.astype(jnp.bfloat16),
                preferred_element_type=jnp.float32) + b1[None, :].astype(jnp.float32)
    if activation == "relu":
        h = jnp.maximum(h, 0.0)
    if keep_mask is not None:
        h = h * keep_mask
    return (jnp.dot(h.astype(jnp.bfloat16), w2.astype(jnp.bfloat16),
                    preferred_element_type=jnp.float32)
            + b2[None, :].astype(jnp.float32))


# ---------------------------------- main --------------------------------------

if __name__ == "__main__":
    key = jax.random.PRNGKey(0)
    B, input_dim, hidden_dim, output_dim = 200, 48, 64, 32
    dropout_rate = 0.1

    ks = jax.random.split(key, 6)
    # torch.nn.Linear-style init (uniform +-1/sqrt(fan_in)); weights stored (in, out).
    lim1 = 1.0 / jnp.sqrt(jnp.float32(input_dim))
    w1 = jax.random.uniform(ks[0], (input_dim, hidden_dim), jnp.float32, -lim1, lim1)
    b1 = jax.random.uniform(ks[1], (hidden_dim,), jnp.float32, -lim1, lim1)
    lim2 = 1.0 / jnp.sqrt(jnp.float32(hidden_dim))
    w2 = jax.random.uniform(ks[2], (hidden_dim, output_dim), jnp.float32, -lim2, lim2)
    b2 = jax.random.uniform(ks[3], (output_dim,), jnp.float32, -lim2, lim2)
    x = jax.random.normal(ks[4], (B, input_dim), jnp.float32)

    prepared = prepare_mlp_params(w1, b1, w2, b2)   # one-time padding/cast (hoisted)

    # ---- eval mode (dropout is identity) ----
    out_eval = jax.block_until_ready(
        mlp_forward(x, prepared, activation="relu", dropout_rate=dropout_rate,
                    training=False))
    ref_eval = reference_forward(x, w1, b1, w2, b2, activation="relu")
    assert out_eval.shape == (B, output_dim)
    err_e = float(jnp.max(jnp.abs(out_eval - ref_eval)))
    assert jnp.allclose(out_eval, ref_eval, atol=2e-3, rtol=2e-3), (
        "eval mismatch, max abs diff = %e" % err_e)

    # ---- training mode (dropout active; mask is deterministic given rng_key) ----
    drop_key = ks[5]
    out_train = jax.block_until_ready(
        mlp_forward(x, prepared, activation="relu", dropout_rate=dropout_rate,
                    training=True, rng_key=drop_key))
    H_p = prepared["w1"].shape[1]
    mask_full = make_dropout_mask(drop_key, B, H_p, dropout_rate)
    ref_train = reference_forward(x, w1, b1, w2, b2, activation="relu",
                                  keep_mask=mask_full[:, :hidden_dim])
    assert out_train.shape == (B, output_dim)
    err_t = float(jnp.max(jnp.abs(out_train - ref_train)))
    assert jnp.allclose(out_train, ref_train, atol=2e-3, rtol=2e-3), (
        "train mismatch, max abs diff = %e" % err_t)
    assert bool(jnp.all(jnp.isfinite(out_train)))

    print("KERNEL_OK")
</pallas_src>

<mosaic_0001>
module attributes {stable_mosaic.version = 11 : i64} {
  func.func @_mlp_kernel(%arg0: i32, %arg1: memref<104x48xf32, #tpu.memory_space<vmem>>, %arg2: memref<48x128xbf16, #tpu.memory_space<vmem>>, %arg3: memref<1x128xf32, #tpu.memory_space<vmem>>, %arg4: memref<128x128xbf16, #tpu.memory_space<vmem>>, %arg5: memref<1x128xf32, #tpu.memory_space<vmem>>, %arg6: memref<104x128xf32, #tpu.memory_space<vmem>>) attributes {dimension_semantics = [#tpu.dimension_semantics<parallel>], iteration_bounds = array<i64: 2>, scalar_prefetch = 0 : i64, scratch_operands = 0 : i64, tpu.core_type = #tpu.core_type<tc>, window_params = [{transform_indices = @transform_0, window_bounds = array<i64: 104, 48>}, {pipeline_mode = #tpu.pipeline_mode<synchronous>, transform_indices = @transform_1, window_bounds = array<i64: 48, 128>}, {pipeline_mode = #tpu.pipeline_mode<synchronous>, transform_indices = @transform_2, window_bounds = array<i64: 1, 128>}, {pipeline_mode = #tpu.pipeline_mode<synchronous>, transform_indices = @transform_3, window_bounds = array<i64: 128, 128>}, {pipeline_mode = #tpu.pipeline_mode<synchronous>, transform_indices = @transform_4, window_bounds = array<i64: 1, 128>}, {transform_indices = @transform_5, window_bounds = array<i64: 104, 128>}]} {
    %c0 = arith.constant 0 : index
    %c0_0 = arith.constant 0 : index
    %0 = vector.load %arg1[%c0, %c0_0] : memref<104x48xf32, #tpu.memory_space<vmem>>, vector<104x48xf32>
    %1 = arith.truncf %0 : vector<104x48xf32> to vector<104x48xbf16>
    %c0_1 = arith.constant 0 : index
    %c0_2 = arith.constant 0 : index
    %2 = vector.load %arg2[%c0_1, %c0_2] : memref<48x128xbf16, #tpu.memory_space<vmem>>, vector<48x128xbf16>
    %cst = arith.constant dense<0.000000e+00> : vector<104x128xf32>
    %3 = tpu.matmul %1, %2, %cst {dimension_numbers = #tpu.dot_dimension_numbers<[1], [0], [0], [1], [0, 0, 1, 1], [], []>} : vector<104x48xbf16>, vector<48x128xbf16>, vector<104x128xf32> -> vector<104x128xf32>
    %c0_3 = arith.constant 0 : index
    %c0_4 = arith.constant 0 : index
    %4 = vector.load %arg3[%c0_3, %c0_4] : memref<1x128xf32, #tpu.memory_space<vmem>>, vector<1x128xf32>
    %5 = vector.broadcast %4 : vector<1x128xf32> to vector<104x128xf32>
    %6 = arith.addf %3, %5 : vector<104x128xf32>
    %cst_5 = arith.constant 0.000000e+00 : f32
    %7 = vector.broadcast %cst_5 : f32 to vector<104x128xf32>
    %8 = arith.maximumf %6, %7 : vector<104x128xf32>
    %9 = arith.truncf %8 : vector<104x128xf32> to vector<104x128xbf16>
    %c0_6 = arith.constant 0 : index
    %c0_7 = arith.constant 0 : index
    %10 = vector.load %arg4[%c0_6, %c0_7] : memref<128x128xbf16, #tpu.memory_space<vmem>>, vector<128x128xbf16>
    %cst_8 = arith.constant dense<0.000000e+00> : vector<104x128xf32>
    %11 = tpu.matmul %9, %10, %cst_8 {dimension_numbers = #tpu.dot_dimension_numbers<[1], [0], [0], [1], [0, 0, 1, 1], [], []>} : vector<104x128xbf16>, vector<128x128xbf16>, vector<104x128xf32> -> vector<104x128xf32>
    %c0_9 = arith.constant 0 : index
    %c0_10 = arith.constant 0 : index
    %12 = vector.load %arg5[%c0_9, %c0_10] : memref<1x128xf32, #tpu.memory_space<vmem>>, vector<1x128xf32>
    %13 = vector.broadcast %12 : vector<1x128xf32> to vector<104x128xf32>
    %14 = arith.addf %11, %13 : vector<104x128xf32>
    %c0_11 = arith.constant 0 : index
    %c0_12 = arith.constant 0 : index
    %15 = vector.load %arg6[%c0_11, %c0_12] : memref<104x128xf32, #tpu.memory_space<vmem>>, vector<104x128xf32>
    tpu.vector_store %arg6[%c0_11, %c0_12], %14 {strides = array<i32>} : memref<104x128xf32, #tpu.memory_space<vmem>>, vector<104x128xf32>,
    return
  }
  func.func @transform_0(%arg0: i32) -> (i32, i32) {
    %c0_i32 = arith.constant 0 : i32
    %c0_i32_0 = arith.constant 0 : i32
    return %arg0, %c0_i32 : i32, i32
  }
  func.func @transform_1(%arg0: i32) -> (i32, i32) {
    %c0_i32 = arith.constant 0 : i32
    %c0_i32_0 = arith.constant 0 : i32
    %c0_i32_1 = arith.constant 0 : i32
    return %c0_i32, %c0_i32_0 : i32, i32
  }
  func.func @transform_2(%arg0: i32) -> (i32, i32) {
    %c0_i32 = arith.constant 0 : i32
    %c0_i32_0 = arith.constant 0 : i32
    %c0_i32_1 = arith.constant 0 : i32
    return %c0_i32, %c0_i32_0 : i32, i32
  }
  func.func @transform_3(%arg0: i32) -> (i32, i32) {
    %c0_i32 = arith.constant 0 : i32
    %c0_i32_0 = arith.constant 0 : i32
    %c0_i32_1 = arith.constant 0 : i32
    return %c0_i32, %c0_i32_0 : i32, i32
  }
  func.func @transform_4(%arg0: i32) -> (i32, i32) {
    %c0_i32 = arith.constant 0 : i32
    %c0_i32_0 = arith.constant 0 : i32
    %c0_i32_1 = arith.constant 0 : i32
    return %c0_i32, %c0_i32_0 : i32, i32
  }
  func.func @transform_5(%arg0: i32) -> (i32, i32) {
    %c0_i32 = arith.constant 0 : i32
    %c0_i32_0 = arith.constant 0 : i32
    return %arg0, %c0_i32 : i32, i32
  }
}

</mosaic_0001>

<llo_original>
// kernel: tpu_custom_call.1
$region0: #{tpu_custom_call.1}
  #allocation0 [shape = 'u32[]', space=smem, size = 0x4, offset = 0x4, fixed_abs, tag = 'smem constant byte address 0x4 - core index']
  #allocation1 [shape = 'u32[144,128]{1,0:T(1,128)}', space=vmem, size = 0x12000, scoped, tag = 'internal scratch']
  %s0 = inlined_call_operand.vmem [shape: f32[200,48], index: 0, kind: input, shape index: {}]
  %s1 = inlined_call_operand.vmem [shape: bf16[48,128], index: 1, kind: input, shape index: {}]
  %s2 = inlined_call_operand.vmem [shape: f32[1,128], index: 2, kind: input, shape index: {}]
  %s3 = inlined_call_operand.vmem [shape: bf16[128,128], index: 3, kind: input, shape index: {}]
  %s4 = inlined_call_operand.vmem [shape: f32[1,128], index: 4, kind: input, shape index: {}]
  %s5 = inlined_call_operand.hbm [shape: f32[200,128], index: 5, kind: output, shape index: {}]
  %s6 = sld [smem:[#allocation0]]
  $region53: #{tpu_custom_call.1} parent=0
    _
  %s8 = ssub.s32 1, %s6
  %s9 = scalar_select 0, %s8, %s6
  $region1: #{tpu_custom_call.1} parent=0
    #allocation2 [shape = 'u8[106496]{0}', space=vmem, size = 0x1a000, scoped, tag = 'output window, operand 0']
    #allocation3 [shape = 's32[2]{0}', space=sflag, size = 0x8, scoped, tag = 'scoped memory for tpu_custom_call.1']
    %10 = vsyncpa [#allocation3], 0
    %s11 = scalar_lea.sflag [#allocation3], 1
    %12 = vsyncpa %s11, 0
    loop: start=0, step=1, limit=4
    $region2: #{tpu_custom_call.1} parent=1 // loop_pre_header
      _
    $region3: #{tpu_custom_call.1} parent=1 // loop_header
      %s14 = sphi 0, %s18
      %p15 = scmp.ge.s32.totalorder %s14, 4
      %s24 = sphi 0, %s26
      %s27 = sphi 0, %s24
      %s28 = sphi 0, %s27
      %s44 = sphi 0, %s28
      %s48 = sphi 0, %s48
      %s50 = sphi 0, %s48
      %s51 = sphi 0, %s50
      %s65 = sphi 0, %s51
      %s69 = sphi 0, %s69
      %s71 = sphi 0, %s69
      %s72 = sphi 0, %s71
      %s86 = sphi 0, %s72
      %s90 = sphi 0, %s90
      %s92 = sphi 0, %s90
      %s93 = sphi 0, %s92
      %s107 = sphi 0, %s93
      %s111 = sphi 0, %s111
      %s113 = sphi 0, %s111
      %s114 = sphi 0, %s113
      %s128 = sphi 0, %s114
      %s134 = sphi 0, %s136
      %s137 = sphi 0, %s134
      %s138 = sphi 0, %s137
      %s154 = sphi 0, %s138
    $region4: #{tpu_custom_call.1} parent=1 // loop_header_branch
      %17 = sbr.rel (%p15) target = $region8
    $region5: #{tpu_custom_call.1} parent=1 // loop_body
      %s19 = ssub.s32 %s14, 1
      %s20 = ssub.s32 %s14, 2
      %s21 = sadd.s32 %s14, 1
      %s22 = ssub.s32 %s14, %s21
      %p23 = scmp.eq.s32.totalorder %s22, 0
      %s25 = sadd.s32 %s24, 1
      %s26 = scalar_select %p23, %s24, %s25
      %p29 = pneg %p23
      %p30 = scmp.eq.s32.totalorder %s14, 1
      %p31 = por %p29, %p30
      %p32 = scmp.ne.s32.totalorder %s24, %s27
      %p33 = scmp.eq.s32.totalorder %s14, 0
      %p34 = por %p32, %p33
      %p35 = scmp.ne.s32.totalorder %s24, %s27
      %p36 = scmp.eq.s32.totalorder %s19, 1
      %p37 = por %p35, %p36
      %p38 = scmp.ne.s32.totalorder %s27, %s28
      %p39 = scmp.eq.s32.totalorder %s19, 0
      %p40 = por %p38, %p39
      %p41 = scmp.ne.s32.totalorder %s27, %s28
      %p42 = scmp.eq.s32.totalorder %s20, 1
      %p43 = por %p41, %p42
      %p45 = scmp.ne.s32.totalorder %s28, %s44
      %p46 = scmp.eq.s32.totalorder %s20, 0
      %p47 = por %p45, %p46
      %s49 = sadd.s32 %s48, 1
      %p52 = scmp.eq.s32.totalorder %s14, 1
      %p53 = scmp.ne.s32.totalorder %s48, %s50
      %p54 = scmp.eq.s32.totalorder %s14, 0
      %p55 = por %p53, %p54
      %p56 = scmp.ne.s32.totalorder %s48, %s50
      %p57 = scmp.eq.s32.totalorder %s19, 1
      %p58 = por %p56, %p57
      %p59 = scmp.ne.s32.totalorder %s50, %s51
      %p60 = scmp.eq.s32.totalorder %s19, 0
      %p61 = por %p59, %p60
      %p62 = scmp.ne.s32.totalorder %s50, %s51
      %p63 = scmp.eq.s32.totalorder %s20, 1
      %p64 = por %p62, %p63
      %p66 = scmp.ne.s32.totalorder %s51, %s65
      %p67 = scmp.eq.s32.totalorder %s20, 0
      %p68 = por %p66, %p67
      %s70 = sadd.s32 %s69, 1
      %p73 = scmp.eq.s32.totalorder %s14, 1
      %p74 = scmp.ne.s32.totalorder %s69, %s71
      %p75 = scmp.eq.s32.totalorder %s14, 0
      %p76 = por %p74, %p75
      %p77 = scmp.ne.s32.totalorder %s69, %s71
      %p78 = scmp.eq.s32.totalorder %s19, 1
      %p79 = por %p77, %p78
      %p80 = scmp.ne.s32.totalorder %s71, %s72
      %p81 = scmp.eq.s32.totalorder %s19, 0
      %p82 = por %p80, %p81
      %p83 = scmp.ne.s32.totalorder %s71, %s72
      %p84 = scmp.eq.s32.totalorder %s20, 1
      %p85 = por %p83, %p84
      %p87 = scmp.ne.s32.totalorder %s72, %s86
      %p88 = scmp.eq.s32.totalorder %s20, 0
      %p89 = por %p87, %p88
      %s91 = sadd.s32 %s90, 1
      %p94 = scmp.eq.s32.totalorder %s14, 1
      %p95 = scmp.ne.s32.totalorder %s90, %s92
      %p96 = scmp.eq.s32.totalorder %s14, 0
      %p97 = por %p95, %p96
      %p98 = scmp.ne.s32.totalorder %s90, %s92
      %p99 = scmp.eq.s32.totalorder %s19, 1
      %p100 = por %p98, %p99
      %p101 = scmp.ne.s32.totalorder %s92, %s93
      %p102 = scmp.eq.s32.totalorder %s19, 0
      %p103 = por %p101, %p102
      %p104 = scmp.ne.s32.totalorder %s92, %s93
      %p105 = scmp.eq.s32.totalorder %s20, 1
      %p106 = por %p104, %p105
      %p108 = scmp.ne.s32.totalorder %s93, %s107
      %p109 = scmp.eq.s32.totalorder %s20, 0
      %p110 = por %p108, %p109
      %s112 = sadd.s32 %s111, 1
      %p115 = scmp.eq.s32.totalorder %s14, 1
      %p116 = scmp.ne.s32.totalorder %s111, %s113
      %p117 = scmp.eq.s32.totalorder %s14, 0
      %p118 = por %p116, %p117
      %p119 = scmp.ne.s32.totalorder %s111, %s113
      %p120 = scmp.eq.s32.totalorder %s19, 1
      %p121 = por %p119, %p120
      %p122 = scmp.ne.s32.totalorder %s113, %s114
      %p123 = scmp.eq.s32.totalorder %s19, 0
      %p124 = por %p122, %p123
      %p125 = scmp.ne.s32.totalorder %s113, %s114
      %p126 = scmp.eq.s32.totalorder %s20, 1
      %p127 = por %p125, %p126
      %p129 = scmp.ne.s32.totalorder %s114, %s128
      %p130 = scmp.eq.s32.totalorder %s20, 0
      %p131 = por %p129, %p130
      %s132 = ssub.s32 %s14, %s21
      %p133 = scmp.eq.s32.totalorder %s132, 0
      %s135 = sadd.s32 %s134, 1
      %s136 = scalar_select %p133, %s134, %s135
      %p139 = pneg %p133
      %p140 = scmp.eq.s32.totalorder %s14, 1
      %p141 = por %p139, %p140
      %p142 = scmp.ne.s32.totalorder %s134, %s137
      %p143 = scmp.eq.s32.totalorder %s14, 0
      %p144 = por %p142, %p143
      %p145 = scmp.ne.s32.totalorder %s134, %s137
      %p146 = scmp.eq.s32.totalorder %s19, 1
      %p147 = por %p145, %p146
      %p148 = scmp.ne.s32.totalorder %s137, %s138
      %p149 = scmp.eq.s32.totalorder %s19, 0
      %p150 = por %p148, %p149
      %p151 = scmp.ne.s32.totalorder %s137, %s138
      %p152 = scmp.eq.s32.totalorder %s20, 1
      %p153 = por %p151, %p152
      %p155 = scmp.ne.s32.totalorder %s138, %s154
      %p156 = scmp.eq.s32.totalorder %s20, 0
      %p157 = por %p155, %p156
      %p158 = scmp.le.s32.totalorder 1, %s14
      %p159 = scmp.lt.s32.totalorder %s14, 3
      %p160 = pnand %p158, %p159
      %p161 = pneg %p160
      // Predicated region
      $region9: #{tpu_custom_call.1} parent=5 // pred_check
        _
      $region10: #{tpu_custom_call.1} parent=5 // pred_check_branch
        %163 = sbr.rel (%p160) target = $region12
      $region11: #{tpu_custom_call.1} parent=5 // pred_region
        %s164 = ssub.s32 %s14, 1
        // Predicated region
        $region13: #{tpu_custom_call.1} parent=11 // pred_check
          %p165 = pneg %p61
        $region14: #{tpu_custom_call.1} parent=11 // pred_check_branch
          %167 = sbr.rel (%p165) target = $region16
        $region15: #{tpu_custom_call.1} parent=11 // pred_region
          _
        $region16: #{tpu_custom_call.1} parent=11 // pred_fallthru
          _
        // Predicated region
        $region17: #{tpu_custom_call.1} parent=11 // pred_check
          %p168 = pneg %p82
        $region18: #{tpu_custom_call.1} parent=11 // pred_check_branch
          %170 = sbr.rel (%p168) target = $region20
        $region19: #{tpu_custom_call.1} parent=11 // pred_region
          _
        $region20: #{tpu_custom_call.1} parent=11 // pred_fallthru
          _
        // Predicated region
        $region21: #{tpu_custom_call.1} parent=11 // pred_check
          %p171 = pneg %p103
        $region22: #{tpu_custom_call.1} parent=11 // pred_check_branch
          %173 = sbr.rel (%p171) target = $region24
        $region23: #{tpu_custom_call.1} parent=11 // pred_region
          _
        $region24: #{tpu_custom_call.1} parent=11 // pred_fallthru
          _
        // Predicated region
        $region25: #{tpu_custom_call.1} parent=11 // pred_check
          %p174 = pneg %p124
        $region26: #{tpu_custom_call.1} parent=11 // pred_check_branch
          %176 = sbr.rel (%p174) target = $region28
        $region27: #{tpu_custom_call.1} parent=11 // pred_region
          _
        $region28: #{tpu_custom_call.1} parent=11 // pred_fallthru
          _
      $region12: #{tpu_custom_call.1} parent=5 // pred_fallthru
        _
      %p177 = scmp.lt.s32.totalorder %s14, 2
      // Predicated region
      $region29: #{tpu_custom_call.1} parent=5 // pred_check
        %p178 = pneg %p177
      $region30: #{tpu_custom_call.1} parent=5 // pred_check_branch
        %180 = sbr.rel (%p178) target = $region32
      $region31: #{tpu_custom_call.1} parent=5 // pred_region
        // Predicated region
        $region33: #{tpu_custom_call.1} parent=31 // pred_check
          %p181 = pneg %p34
        $region34: #{tpu_custom_call.1} parent=31 // pred_check_branch
          %183 = sbr.rel (%p181) target = $region36
        $region35: #{tpu_custom_call.1} parent=31 // pred_region
          %s184 = smul.u32 13, %s14
          %s185 = ssub.s32 25, %s184
          %p186 = scmp.lt.s32.totalorder %s185, 13
          %s187 = scalar_select %p186, %s185, 13
          %s188 = smul.u32 128, %s187
          %p189 = scmp.lt.s32.totalorder %s184, 24
          %s190 = scalar_select %p189, %s184, 24
          %s191 = smul.addr %s190, 8
          %s192 = scalar_lea.vmem %s0, %s191
          %s193 = smul.u32 13, %s14
          %s194 = ssub.s32 25, %s193
          %p195 = scmp.lt.s32.totalorder %s194, 13
          %s196 = scalar_select %p195, %s194, 13
          %s197 = smul.u32 128, %s196
        $region36: #{tpu_custom_call.1} parent=31 // pred_fallthru
          _
      $region32: #{tpu_custom_call.1} parent=5 // pred_fallthru
        _
      %p198 = scmp.le.s32.totalorder 1, %s14
      %p199 = scmp.lt.s32.totalorder %s14, 3
      %p200 = pnand %p198, %p199
      %p201 = pneg %p200
      // Predicated region
      $region37: #{tpu_custom_call.1} parent=5 // pred_check
        _
      $region38: #{tpu_custom_call.1} parent=5 // pred_check_branch
        %203 = sbr.rel (%p200) target = $region40
      $region39: #{tpu_custom_call.1} parent=5 // pred_region
        %s204 = ssub.s32 %s14, 1
        %s205 = smul.u32 13, %s19
        %s206 = ssub.s32 25, %s205
        %p207 = scmp.lt.s32.totalorder %s206, 13
        %s208 = scalar_select %p207, %s206, 13
        %s209 = smul.u32 128, %s208
        %p210 = scmp.lt.s32.totalorder %s205, 24
        %s211 = scalar_select %p210, %s205, 24
        %s212 = smul.addr %s211, 8
        %s213 = scalar_lea.vmem %s0, %s212
        %p214 = pneg %p40
        %p215 = pneg %p37
        %p216 = pneg %p61
        %p217 = pneg %p58
        %p218 = pneg %p82
        %p219 = pneg %p79
        %p220 = pneg %p103
        %p221 = pneg %p100
        %p222 = pneg %p124
        %p223 = pneg %p121
        %p224 = pneg %p150
        %p225 = pneg %p147
        %s226 = sand.u32 %s137, 1
        %s227 = scalar_lea.sflag [#allocation3], %s226
        %s228 = sand.u32 %s137, 1
        %s229 = smul.addr %s228, 104
        %s230 = scalar_lea.vmem [#allocation2], %s229
        %s231 = smul.u32 13, %s19
        %s232 = ssub.s32 25, %s231
        %p233 = scmp.lt.s32.totalorder %s232, 13
        %s234 = scalar_select %p233, %s232, 13
        %s235 = smul.u32 128, %s234
        %p236 = scmp.lt.s32.totalorder %s231, 24
        %s237 = scalar_select %p236, %s231, 24
        %s238 = smul.addr %s237, 8
        %s239 = scalar_lea.vmem %s0, %s238
        %s240 = smul.u32 13, %s19
        %s241 = ssub.s32 25, %s240
        %p242 = scmp.lt.s32.totalorder %s241, 13
        %s243 = scalar_select %p242, %s241, 13
        %s244 = smul.u32 128, %s243
        %s245 = smul.u32 13, %s19
        %s246 = ssub.s32 25, %s245
        %p247 = scmp.lt.s32.totalorder %s246, 13
        %s248 = scalar_select %p247, %s246, 13
        %s249 = smul.u32 128, %s248
        %v251 = vld [vmem:[%s239] sm:$0xff]
        %v252 = vld [vmem:[%s239 + $0x8] sm:$0xff]
        %v253 = vld [vmem:[%s239 + $0x10] sm:$0xff]
        %v254 = vld [vmem:[%s239 + $0x18] sm:$0xff]
        %v255 = vld [vmem:[%s239 + $0x20] sm:$0xff]
        %v256 = vld [vmem:[%s239 + $0x28] sm:$0xff]
        %v257 = vld [vmem:[%s239 + $0x30] sm:$0xff]
        %v258 = vld [vmem:[%s239 + $0x38] sm:$0xff]
        %v259 = vld [vmem:[%s239 + $0x40] sm:$0xff]
        %v260 = vld [vmem:[%s239 + $0x48] sm:$0xff]
        %v261 = vld [vmem:[%s239 + $0x50] sm:$0xff]
        %v262 = vld [vmem:[%s239 + $0x58] sm:$0xff]
        %v263 = vld [vmem:[%s239 + $0x60] sm:$0xff]
        %v264 = vpack.c.bf16 %v252, %v251
        %v265 = vpack.c.bf16 %v254, %v253
        %v266 = vpack.c.bf16 %v256, %v255
        %v267 = vpack.c.bf16 %v258, %v257
        %v268 = vpack.c.bf16 %v260, %v259
        %v269 = vpack.c.bf16 %v262, %v261
        %v270 = vpack.c.bf16 %v263, %v263
        %v271 = vld [vmem:[%s1] sm:$0xf]
        %v272 = vld [vmem:[%s1 + $0x4] sm:$0xf]
        %v273 = vld [vmem:[%s1 + $0x8] sm:$0xf]
        %v274 = vld [vmem:[%s1 + $0xc] sm:$0xf]
        %v275 = vld [vmem:[%s1 + $0x10] sm:$0xf]
        %v276 = vld [vmem:[%s1 + $0x14] sm:$0xf]
        %v277 = vld [vmem:[%s2] sm:$0x1]
        %v279 = vlaneseq
        %v280 = vshrl.u32 %v279, 7
        %v281 = vsub.s32 0, %v280
        %v282 = vrot.slane %v277, %v281
        %v290 = vunpack.c.l.b16 %v271
        %v291 = vunpack.c.l.b16 %v272
        %v292 = vunpack.c.l.b16 %v273
        %v293 = vunpack.c.l.b16 %v274
        %v294 = vunpack.c.l.b16 %v275
        %v295 = vunpack.c.l.b16 %v276
        %v296 = vpack.c.b16 %v291, %v290
        %v297 = vpack.c.b16 %v293, %v292
        %v298 = vpack.c.b16 %v295, %v294
        %vm302 = vcmask 392192
        %v304 = vsel %vm302, %v264, 0
        %v307 = vsel %vm302, %v265, 0
        %v310 = vsel %vm302, %v266, 0
        %v313 = vsel %vm302, %v267, 0
        %v316 = vsel %vm302, %v268, 0
        %v319 = vsel %vm302, %v269, 0
        %v322 = vsel %vm302, %v270, 0
        %324 = vmatprep.subr.bf16.mxu0 0
        %325 = vmatpush1.bf16.msra.mxu0 0
        %326 = vmatprep.subr.bf16.mxu0 0
        %327 = vmatpush1.bf16.msra.mxu0 0
        %328 = vmatprep.subr.bf16.mxu0 0
        %329 = vmatpush1.bf16.msra.mxu0 0
        %330 = vmatprep.subr.bf16.mxu0 0
        %331 = vmatpush1.bf16.msra.mxu0 0
        %332 = vmatprep.subr.bf16.mxu0 0
        %333 = vmatpush1.bf16.msra.mxu0 0
        %334 = vmatprep.subr.bf16.mxu0 0
        %335 = vmatpush1.bf16.msra.mxu0 %v298
        %336 = vmatprep.subr.bf16.mxu0 0
        %337 = vmatpush1.bf16.msra.mxu0 %v297
        %338 = vmatprep.subr.bf16.mxu0 0
        %339 = vmatpush1.bf16.msra.mxu0 %v296
        %340 = vmatprep.subr.bf16.mxu0 0
        %341 = vmatpush2.bf16.msra.mxu0 0
        %342 = vmatprep.subr.bf16.mxu0 0
        %343 = vmatpush2.bf16.msra.mxu0 0
        %344 = vmatprep.subr.bf16.mxu0 0
        %345 = vmatpush2.bf16.msra.mxu0 0
        %346 = vmatprep.subr.bf16.mxu0 0
        %347 = vmatpush2.bf16.msra.mxu0 0
        %348 = vmatprep.subr.bf16.mxu0 0
        %349 = vmatpush2.bf16.msra.mxu0 0
        %350 = vmatprep.subr.bf16.mxu0 0
        %351 = vmatpush2.bf16.msra.mxu0 0
        %352 = vmatprep.subr.bf16.mxu0 0
        %353 = vmatpush2.bf16.msra.mxu0 0
        %354 = vmatprep.subr.bf16.mxu0 0
        %355 = vmatpush2.bf16.msra.mxu0 0
        %356 = vmatprep.mubr.bf16.mxu0 0
        %357 = vmatmul.mubr.bf16.gmra.mxu0 %v304
        %v358 = vpop.f32.mrf.mxu0
        %v359 = vadd.f32 %v282, %v358
        %v360 = vpop.f32.mrf.mxu0
        %v361 = vpop.f32.mrf.mxu0
        %v362 = vadd.f32 %v282, %v361
        %v363 = vpop.f32.mrf.mxu0
        %364 = vmatprep.mubr.bf16.mxu0 0
        %365 = vmatmul.mubr.bf16.gmra.mxu0 %v307
        %v366 = vpop.f32.mrf.mxu0
        %v367 = vadd.f32 %v282, %v366
        %v368 = vpop.f32.mrf.mxu0
        %v369 = vpop.f32.mrf.mxu0
        %v370 = vadd.f32 %v282, %v369
        %v371 = vpop.f32.mrf.mxu0
        %372 = vmatprep.mubr.bf16.mxu0 0
        %373 = vmatmul.mubr.bf16.gmra.mxu0 %v310
        %v374 = vpop.f32.mrf.mxu0
        %v375 = vadd.f32 %v282, %v374
        %v376 = vpop.f32.mrf.mxu0
        %v377 = vpop.f32.mrf.mxu0
        %v378 = vadd.f32 %v282, %v377
        %v379 = vpop.f32.mrf.mxu0
        %380 = vmatprep.mubr.bf16.mxu0 0
        %381 = vmatmul.mubr.bf16.gmra.mxu0 %v313
        %v382 = vpop.f32.mrf.mxu0
        %v383 = vadd.f32 %v282, %v382
        %v384 = vpop.f32.mrf.mxu0
        %v385 = vpop.f32.mrf.mxu0
        %v386 = vadd.f32 %v282, %v385
        %v387 = vpop.f32.mrf.mxu0
        %388 = vmatprep.mubr.bf16.mxu0 0
        %389 = vmatmul.mubr.bf16.gmra.mxu0 %v316
        %v390 = vpop.f32.mrf.mxu0
        %v391 = vadd.f32 %v282, %v390
        %v392 = vpop.f32.mrf.mxu0
        %v393 = vpop.f32.mrf.mxu0
        %v394 = vadd.f32 %v282, %v393
        %v395 = vpop.f32.mrf.mxu0
        %396 = vmatprep.mubr.bf16.mxu0 0
        %397 = vmatmul.mubr.bf16.gmra.mxu0 %v319
        %v398 = vpop.f32.mrf.mxu0
        %v399 = vadd.f32 %v282, %v398
        %v400 = vpop.f32.mrf.mxu0
        %v401 = vpop.f32.mrf.mxu0
        %v402 = vadd.f32 %v282, %v401
        %v403 = vpop.f32.mrf.mxu0
        %404 = vmatprep.mubr.bf16.mxu0 0
        %405 = vmatmul.mubr.bf16.gmra.mxu0 %v322
        %v406 = vpop.f32.mrf.mxu0
        %v407 = vadd.f32 %v282, %v406
        %v408 = vpop.f32.mrf.mxu0
        %v409 = vpop.f32.mrf.mxu0
        %v410 = vpop.f32.mrf.mxu0
        %411 = vdwg.mxu0
        %v412 = vmax.f32 %v359, 0.0
        %v413 = vmax.f32 %v362, 0.0
        %v414 = vmax.f32 %v367, 0.0
        %v415 = vmax.f32 %v370, 0.0
        %v416 = vmax.f32 %v375, 0.0
        %v417 = vmax.f32 %v378, 0.0
        %v418 = vmax.f32 %v383, 0.0
        %v419 = vmax.f32 %v386, 0.0
        %v420 = vmax.f32 %v391, 0.0
        %v421 = vmax.f32 %v394, 0.0
        %v422 = vmax.f32 %v399, 0.0
        %v423 = vmax.f32 %v402, 0.0
        %v424 = vmax.f32 %v407, 0.0
        %v425 = vpack.c.bf16 %v413, %v412
        %v426 = vpack.c.bf16 %v415, %v414
        %v427 = vpack.c.bf16 %v417, %v416
        %v428 = vpack.c.bf16 %v419, %v418
        %v429 = vpack.c.bf16 %v421, %v420
        %v430 = vpack.c.bf16 %v423, %v422
        %v431 = vpack.c.bf16 %v424, %v424
        %v432 = vld [vmem:[%s3] sm:$0xf]
        %v433 = vld [vmem:[%s3 + $0x4] sm:$0xf]
        %v434 = vld [vmem:[%s3 + $0x8] sm:$0xf]
        %v435 = vld [vmem:[%s3 + $0xc] sm:$0xf]
        %v436 = vld [vmem:[%s3 + $0x10] sm:$0xf]
        %v437 = vld [vmem:[%s3 + $0x14] sm:$0xf]
        %v438 = vld [vmem:[%s3 + $0x18] sm:$0xf]
        %v439 = vld [vmem:[%s3 + $0x1c] sm:$0xf]
        %v440 = vld [vmem:[%s3 + $0x20] sm:$0xf]
        %v441 = vld [vmem:[%s3 + $0x24] sm:$0xf]
        %v442 = vld [vmem:[%s3 + $0x28] sm:$0xf]
        %v443 = vld [vmem:[%s3 + $0x2c] sm:$0xf]
        %v444 = vld [vmem:[%s3 + $0x30] sm:$0xf]
        %v445 = vld [vmem:[%s3 + $0x34] sm:$0xf]
        %v446 = vld [vmem:[%s3 + $0x38] sm:$0xf]
        %v447 = vld [vmem:[%s3 + $0x3c] sm:$0xf]
        %v448 = vld [vmem:[%s4] sm:$0x1]
        %v450 = vlaneseq
        %v451 = vshrl.u32 %v450, 7
        %v452 = vsub.s32 0, %v451
        %v453 = vrot.slane %v448, %v452
        %v471 = vunpack.c.l.b16 %v432
        %v472 = vunpack.c.l.b16 %v433
        %v473 = vunpack.c.l.b16 %v434
        %v474 = vunpack.c.l.b16 %v435
        %v475 = vunpack.c.l.b16 %v436
        %v476 = vunpack.c.l.b16 %v437
        %v477 = vunpack.c.l.b16 %v438
        %v478 = vunpack.c.l.b16 %v439
        %v479 = vunpack.c.l.b16 %v440
        %v480 = vunpack.c.l.b16 %v441
        %v481 = vunpack.c.l.b16 %v442
        %v482 = vunpack.c.l.b16 %v443
        %v483 = vunpack.c.l.b16 %v444
        %v484 = vunpack.c.l.b16 %v445
        %v485 = vunpack.c.l.b16 %v446
        %v486 = vunpack.c.l.b16 %v447
        %v487 = vpack.c.b16 %v472, %v471
        %v488 = vpack.c.b16 %v474, %v473
        %v489 = vpack.c.b16 %v476, %v475
        %v490 = vpack.c.b16 %v478, %v477
        %v491 = vpack.c.b16 %v480, %v479
        %v492 = vpack.c.b16 %v482, %v481
        %v493 = vpack.c.b16 %v484, %v483
        %v494 = vpack.c.b16 %v486, %v485
        %503 = vmatprep.subr.bf16.mxu0 0
        %504 = vmatpush1.bf16.msra.mxu0 %v494
        %505 = vmatprep.subr.bf16.mxu0 0
        %506 = vmatpush1.bf16.msra.mxu0 %v493
        %507 = vmatprep.subr.bf16.mxu0 0
        %508 = vmatpush1.bf16.msra.mxu0 %v492
        %509 = vmatprep.subr.bf16.mxu0 0
        %510 = vmatpush1.bf16.msra.mxu0 %v491
        %511 = vmatprep.subr.bf16.mxu0 0
        %512 = vmatpush1.bf16.msra.mxu0 %v490
        %513 = vmatprep.subr.bf16.mxu0 0
        %514 = vmatpush1.bf16.msra.mxu0 %v489
        %515 = vmatprep.subr.bf16.mxu0 0
        %516 = vmatpush1.bf16.msra.mxu0 %v488
        %517 = vmatprep.subr.bf16.mxu0 0
        %518 = vmatpush1.bf16.msra.mxu0 %v487
        %519 = vmatprep.subr.bf16.mxu0 0
        %520 = vmatpush2.bf16.msra.mxu0 0
        %521 = vmatprep.subr.bf16.mxu0 0
        %522 = vmatpush2.bf16.msra.mxu0 0
        %523 = vmatprep.subr.bf16.mxu0 0
        %524 = vmatpush2.bf16.msra.mxu0 0
        %525 = vmatprep.subr.bf16.mxu0 0
        %526 = vmatpush2.bf16.msra.mxu0 0
        %527 = vmatprep.subr.bf16.mxu0 0
        %528 = vmatpush2.bf16.msra.mxu0 0
        %529 = vmatprep.subr.bf16.mxu0 0
        %530 = vmatpush2.bf16.msra.mxu0 0
        %531 = vmatprep.subr.bf16.mxu0 0
        %532 = vmatpush2.bf16.msra.mxu0 0
        %533 = vmatprep.subr.bf16.mxu0 0
        %534 = vmatpush2.bf16.msra.mxu0 0
        %535 = vmatprep.mubr.bf16.mxu0 0
        %536 = vmatmul.mubr.bf16.gmra.mxu0 %v425
        %v537 = vpop.f32.mrf.mxu0
        %v538 = vadd.f32 %v453, %v537
        %v539 = vpop.f32.mrf.mxu0
        %v540 = vpop.f32.mrf.mxu0
        %v541 = vadd.f32 %v453, %v540
        %v542 = vpop.f32.mrf.mxu0
        %543 = vmatprep.mubr.bf16.mxu0 0
        %544 = vmatmul.mubr.bf16.gmra.mxu0 %v426
        %v545 = vpop.f32.mrf.mxu0
        %v546 = vadd.f32 %v453, %v545
        %v547 = vpop.f32.mrf.mxu0
        %v548 = vpop.f32.mrf.mxu0
        %v549 = vadd.f32 %v453, %v548
        %v550 = vpop.f32.mrf.mxu0
        %551 = vmatprep.mubr.bf16.mxu0 0
        %552 = vmatmul.mubr.bf16.gmra.mxu0 %v427
        %v553 = vpop.f32.mrf.mxu0
        %v554 = vadd.f32 %v453, %v553
        %v555 = vpop.f32.mrf.mxu0
        %v556 = vpop.f32.mrf.mxu0
        %v557 = vadd.f32 %v453, %v556
        %v558 = vpop.f32.mrf.mxu0
        %559 = vmatprep.mubr.bf16.mxu0 0
        %560 = vmatmul.mubr.bf16.gmra.mxu0 %v428
        %v561 = vpop.f32.mrf.mxu0
        %v562 = vadd.f32 %v453, %v561
        %v563 = vpop.f32.mrf.mxu0
        %v564 = vpop.f32.mrf.mxu0
        %v565 = vadd.f32 %v453, %v564
        %v566 = vpop.f32.mrf.mxu0
        %567 = vmatprep.mubr.bf16.mxu0 0
        %568 = vmatmul.mubr.bf16.gmra.mxu0 %v429
        %v569 = vpop.f32.mrf.mxu0
        %v570 = vadd.f32 %v453, %v569
        %v571 = vpop.f32.mrf.mxu0
        %v572 = vpop.f32.mrf.mxu0
        %v573 = vadd.f32 %v453, %v572
        %v574 = vpop.f32.mrf.mxu0
        %575 = vmatprep.mubr.bf16.mxu0 0
        %576 = vmatmul.mubr.bf16.gmra.mxu0 %v430
        %v577 = vpop.f32.mrf.mxu0
        %v578 = vadd.f32 %v453, %v577
        %v579 = vpop.f32.mrf.mxu0
        %v580 = vpop.f32.mrf.mxu0
        %v581 = vadd.f32 %v453, %v580
        %v582 = vpop.f32.mrf.mxu0
        %583 = vmatprep.mubr.bf16.mxu0 0
        %584 = vmatmul.mubr.bf16.gmra.mxu0 %v431
        %v585 = vpop.f32.mrf.mxu0
        %v586 = vadd.f32 %v453, %v585
        %v587 = vpop.f32.mrf.mxu0
        %v588 = vpop.f32.mrf.mxu0
        %v589 = vpop.f32.mrf.mxu0
        %590 = vdwg.mxu0
        %591 = vst [vmem:[%s230] sm:$0xff] %v538
        %592 = vst [vmem:[%s230 + $0x8] sm:$0xff] %v541
        %593 = vst [vmem:[%s230 + $0x10] sm:$0xff] %v546
        %594 = vst [vmem:[%s230 + $0x18] sm:$0xff] %v549
        %595 = vst [vmem:[%s230 + $0x20] sm:$0xff] %v554
        %596 = vst [vmem:[%s230 + $0x28] sm:$0xff] %v557
        %597 = vst [vmem:[%s230 + $0x30] sm:$0xff] %v562
        %598 = vst [vmem:[%s230 + $0x38] sm:$0xff] %v565
        %599 = vst [vmem:[%s230 + $0x40] sm:$0xff] %v570
        %600 = vst [vmem:[%s230 + $0x48] sm:$0xff] %v573
        %601 = vst [vmem:[%s230 + $0x50] sm:$0xff] %v578
        %602 = vst [vmem:[%s230 + $0x58] sm:$0xff] %v581
        %603 = vst [vmem:[%s230 + $0x60] sm:$0xff] %v586
        %s604 = sand.u32 %s137, 1
        %s605 = scalar_lea.sflag [#allocation3], %s604
        %s606 = sand.u32 %s137, 1
        %s607 = smul.addr %s606, 104
        %s608 = scalar_lea.vmem [#allocation2], %s607
        // Predicated region
        $region41: #{tpu_custom_call.1} parent=39 // pred_check
          %p609 = pneg %p147
        $region42: #{tpu_custom_call.1} parent=39 // pred_check_branch
          %611 = sbr.rel (%p609) target = $region44
        $region43: #{tpu_custom_call.1} parent=39 // pred_region
          %s612 = smul.u32 13, %s19
          %s613 = ssub.s32 25, %s612
          %p614 = scmp.lt.s32.totalorder %s613, 13
          %s615 = scalar_select %p614, %s613, 13
          %s616 = smul.u32 128, %s615
          %s618 = ssub.s32 1664, %s616
          %619 = vsyncadd %s605, %s618
          %p620 = scmp.ne.s32.totalorder 0, %s616
          %s621 = smul.addr %s612, 128
          %s622 = scalar_lea.hbm %s5, %s621
          %s623 = smul.u32 8, %s615
          %s624 = sshll.u32 %s608, 4
          %s625 = int_to_ptr.vmem [resolvable:$true] %s624
          %s626 = sshll.u32 %s623, 4
          %630 = dma.vmem_to_hbm [thread:$0]  (%p620), %s625, %s626, %s622, %s605, 128, 128, 8
        $region44: #{tpu_custom_call.1} parent=39 // pred_fallthru
          _
      $region40: #{tpu_custom_call.1} parent=5 // pred_fallthru
        _
      %p631 = scmp.le.s32.totalorder 2, %s14
      // Predicated region
      $region45: #{tpu_custom_call.1} parent=5 // pred_check
        %p632 = pneg %p631
      $region46: #{tpu_custom_call.1} parent=5 // pred_check_branch
        %634 = sbr.rel (%p632) target = $region48
      $region47: #{tpu_custom_call.1} parent=5 // pred_region
        %s635 = ssub.s32 %s14, 2
        // Predicated region
        $region49: #{tpu_custom_call.1} parent=47 // pred_check
          %p636 = pneg %p153
        $region50: #{tpu_custom_call.1} parent=47 // pred_check_branch
          %638 = sbr.rel (%p636) target = $region52
        $region51: #{tpu_custom_call.1} parent=47 // pred_region
          %s639 = sand.u32 %s138, 1
          %s640 = scalar_lea.sflag [#allocation3], %s639
          %s641 = sand.u32 %s138, 1
          %s642 = smul.addr %s641, 104
          %s643 = scalar_lea.vmem [#allocation2], %s642
          %644 = dma.done %s640, 1664
        $region52: #{tpu_custom_call.1} parent=47 // pred_fallthru
          _
      $region48: #{tpu_custom_call.1} parent=5 // pred_fallthru
        _
    $region6: #{tpu_custom_call.1} parent=1 // loop_footer
      %s18 = sadd.s32 1, %s14
    $region7: #{tpu_custom_call.1} parent=1 // loop_footer_branch
      %13 = sbr.rel target = $region3
    $region8: #{tpu_custom_call.1} parent=1 // loop_exit
      _
    %645 = vsyncpa [#allocation3], 1
    %s646 = scalar_lea.sflag [#allocation3], 1
    %647 = vsyncpa %s646, 1

</llo_original>
